<compile_context>
chip_gen: v7x
topology: tpu7x:2x2x1
jax: 0.10.0
libtpu: 0.0.40
codegen_flags: <defaults>
</compile_context>

<pallas_src>
import jax
import jax.numpy as jnp
from jax.experimental import pallas as pl
from jax.experimental.pallas import tpu as pltpu


# ----------------------------------------------------------------------------
# Pallas kernel (channel-major blocks: (C, tile_p)).
#   a   = relu(Wgx @ [g; x] + b)               (F_int, T)   -- one MXU matmul
#   psi = sigmoid(sum_c(wpsi[c] * a[c]) + bpsi)   (1, T)     -- VPU + XLU reduce
#   out = x * psi                              (F_l, T)
# ----------------------------------------------------------------------------
def _attention_block_kernel(g_ref, x_ref, wgx_ref, b_ref, wpsi_ref, bpsi_ref,
                            out_ref, gx_ref):
    x = x_ref[...]                                      # (F_l, T)
    f_g = g_ref.shape[0]

    # Pack g and x into one (F_g+F_l, T) operand so the two branch 1x1 convs
    # become a single K = F_g+F_l MXU matmul (halves vmatmul pushes, fills the
    # streamed operand's sublanes).  Static ref slices -> cheap sublane stores.
    gx_ref[:f_g, :] = g_ref[...]
    gx_ref[f_g:, :] = x

    a = jnp.dot(wgx_ref[...], gx_ref[...],
                preferred_element_type=jnp.float32)     # (F_int, T)
    a = jnp.maximum(a + b_ref[...], 0.0)

    # psi 1x1 conv (F_int -> 1) on the VPU (multiply) + cross-sublane reduce
    # (XLU) instead of an MXU matmul -- frees the vector-extended slot.
    s = jnp.sum(a * wpsi_ref[...], axis=0, keepdims=True) + bpsi_ref[0, 0]
    psi = jax.nn.sigmoid(s)                             # (1, T)

    out_ref[...] = (x * psi).astype(out_ref.dtype)      # broadcast over sublanes


# ----------------------------------------------------------------------------
# Generation-aware tiling.
# ----------------------------------------------------------------------------
def _vmem_plan():
    """Returns (spatial token target per step, vmem_limit_bytes or None)."""
    try:
        vmem_bytes = pltpu.get_tpu_info().vmem_capacity_bytes
    except Exception:  # non-TPU backend / interpret mode fallback
        vmem_bytes = 64 << 20
    if vmem_bytes >= (96 << 20):
        # v5e / v6e: 128 MiB physical VMEM, single TensorCore -> big tiles;
        # raise the scoped limit past the 16/32 MiB defaults.
        return 32768, 64 << 20
    # v7x: 64 MiB physical VMEM, 2 TensorCores -> smaller tiles, default limit.
    return 16384, None


def _choose_tile_hw(hw, n_batch, target):
    """Pick a lane-dense spatial tile (multiple of 128, or full extent)."""
    if hw <= target:
        tile = hw                              # full-extent block: always legal
    else:
        # Prefer the largest 128-aligned divisor of hw <= target (no tail).
        tile = 0
        t = (target // 128) * 128
        while t >= 128:
            if hw % t == 0:
                tile = t
                break
            t -= 128
        if tile == 0:
            # No clean divisor: 128-aligned tile with a partial tail block
            # (out-of-bounds writeback is masked by Pallas; per-token math is
            # column-independent so garbage tail columns never leak).
            tile = (target // 128) * 128
    # v7x has 2 TensorCores: make sure the parallel grid has >= 2 steps.
    steps = n_batch * (-(-hw // tile))
    if steps < 2 and hw >= 256:
        tile = max(128, (hw // 2 // 128) * 128)
    return tile


def _attention_block_pallas(g3, x3, wgx, b, wpsi, bpsi):
    """g3: (N, F_g, HW), x3: (N, F_l, HW).  Returns (N, F_l, HW)."""
    N, F_g, HW = g3.shape
    _, F_l, _ = x3.shape
    F_int = wgx.shape[0]

    target, vmem_limit = _vmem_plan()
    tile = _choose_tile_hw(HW, N, target)
    grid = (N, pl.cdiv(HW, tile))

    return pl.pallas_call(
        _attention_block_kernel,
        out_shape=jax.ShapeDtypeStruct((N, F_l, HW), x3.dtype),
        grid_spec=pltpu.PrefetchScalarGridSpec(
            num_scalar_prefetch=0,
            grid=grid,
            in_specs=[
                pl.BlockSpec((None, F_g, tile), lambda n, j: (n, 0, j)),   # g
                pl.BlockSpec((None, F_l, tile), lambda n, j: (n, 0, j)),   # x
                pl.BlockSpec((F_int, F_g + F_l), lambda n, j: (0, 0)),     # Wgx
                pl.BlockSpec((F_int, 1), lambda n, j: (0, 0)),             # b
                pl.BlockSpec((F_int, 1), lambda n, j: (0, 0)),             # wpsi
                pl.BlockSpec(memory_space=pltpu.MemorySpace.SMEM),         # bpsi
            ],
            out_specs=pl.BlockSpec((None, F_l, tile), lambda n, j: (n, 0, j)),
            scratch_shapes=[pltpu.VMEM((F_g + F_l, tile), x3.dtype)],      # gx
        ),
        compiler_params=pltpu.CompilerParams(
            dimension_semantics=("parallel", "parallel"),
            vmem_limit_bytes=vmem_limit),
    )(g3, x3, wgx, b, wpsi, bpsi)


# ----------------------------------------------------------------------------
# NCHW wrapper (matches the PyTorch interface): reshapes only, no transposes,
# no padding.
# ----------------------------------------------------------------------------
@jax.jit
def attention_block_nchw(g_nchw, x_nchw, params):
    N, F_g, H, W = g_nchw.shape
    _, F_l, _, _ = x_nchw.shape
    HW = H * W

    g3 = g_nchw.reshape(N, F_g, HW)
    x3 = x_nchw.reshape(N, F_l, HW)

    out3 = _attention_block_pallas(
        g3, x3, params["wgx"], params["b"], params["wpsi"], params["bpsi"])
    return out3.reshape(N, F_l, H, W)


# ----------------------------------------------------------------------------
# Parameter setup: deterministic init + BN folding (inference-mode BN).
# ----------------------------------------------------------------------------
def _fold_conv_bn(w, b, gamma, beta, mean, var, eps=1e-5):
    # w: (C_out, C_in) from a 1x1 conv, b: (C_out,)
    scale = gamma / jnp.sqrt(var + eps)
    w_eff = w * scale[:, None]
    b_eff = (b - mean) * scale + beta
    return w_eff, b_eff


def make_params(key, F_g, F_l, F_int):
    ks = jax.random.split(key, 6)
    # Conv weights (C_out, C_in) — kernel_size=1, so the 1x1 spatial dims drop.
    wg = jax.random.normal(ks[0], (F_int, F_g), jnp.float32) * 0.1
    bg = jax.random.normal(ks[1], (F_int,), jnp.float32) * 0.1
    wx = jax.random.normal(ks[2], (F_int, F_l), jnp.float32) * 0.1
    bx = jax.random.normal(ks[3], (F_int,), jnp.float32) * 0.1
    wpsi = jax.random.normal(ks[4], (1, F_int), jnp.float32) * 0.1
    bpsi = jax.random.normal(ks[5], (1,), jnp.float32) * 0.1

    # Deterministic (non-trivial) BatchNorm params / running stats.
    def bn(c, off):
        gamma = 1.0 + 0.05 * jnp.arange(c, dtype=jnp.float32)
        beta = 0.02 * jnp.arange(c, dtype=jnp.float32) - 0.1 * off
        mean = 0.01 * jnp.arange(c, dtype=jnp.float32) + 0.05 * off
        var = 1.0 + 0.03 * jnp.arange(c, dtype=jnp.float32)
        return gamma, beta, mean, var

    wg_f, bg_f = _fold_conv_bn(wg, bg, *bn(F_int, 0))
    wx_f, bx_f = _fold_conv_bn(wx, bx, *bn(F_int, 1))
    wpsi_f, bpsi_f = _fold_conv_bn(wpsi, bpsi, *bn(1, 2))

    return dict(
        wgx=jnp.concatenate([wg_f, wx_f], axis=1),   # (F_int, F_g + F_l) fused
        b=(bg_f + bx_f).reshape(F_int, 1),           # fused branch bias
        wpsi=wpsi_f.reshape(F_int, 1),               # column vector -> VPU reduce
        bpsi=bpsi_f.reshape(1, 1),                   # scalar (SMEM)
    )


# ----------------------------------------------------------------------------
# Pure-JAX reference (same folded-BN semantics) for verification.
# ----------------------------------------------------------------------------
def attention_block_reference(g_nchw, x_nchw, params):
    N, F_g, H, W = g_nchw.shape
    _, F_l, _, _ = x_nchw.shape
    g3 = g_nchw.reshape(N, F_g, H * W)
    x3 = x_nchw.reshape(N, F_l, H * W)
    gx = jnp.concatenate([g3, x3], axis=1)
    a = jnp.maximum(
        jnp.einsum("oi,nip->nop", params["wgx"], gx) + params["b"][None], 0.0)
    s = jnp.sum(a * params["wpsi"][None], axis=1, keepdims=True) \
        + params["bpsi"][None]
    psi = jax.nn.sigmoid(s)
    out = x3 * psi
    return out.reshape(N, F_l, H, W)


if __name__ == "__main__":
    key = jax.random.PRNGKey(0)
    k_g, k_x, k_p = jax.random.split(key, 3)

    # Small shapes consistent with the module: F_g = F_l = 4, F_int = 32.
    N, F_g, F_l, F_int, H, W = 2, 4, 4, 32, 16, 16
    g = jax.random.normal(k_g, (N, F_g, H, W), jnp.float32)
    x = jax.random.normal(k_x, (N, F_l, H, W), jnp.float32)

    params = make_params(k_p, F_g, F_l, F_int)

    out = attention_block_nchw(g, x, params)
    out = jax.block_until_ready(out)

    ref = attention_block_reference(g, x, params)
    assert out.shape == (N, F_l, H, W)
    assert jnp.allclose(out, ref, atol=1e-4, rtol=1e-4), "mismatch vs reference"

    print("KERNEL_OK")
</pallas_src>

<mosaic_0001>
module attributes {stable_mosaic.version = 11 : i64} {
  func.func @_attention_block_kernel(%arg0: i32, %arg1: i32, %arg2: memref<1x4x256xf32, #tpu.memory_space<vmem>>, %arg3: memref<1x4x256xf32, #tpu.memory_space<vmem>>, %arg4: memref<32x8xf32, #tpu.memory_space<vmem>>, %arg5: memref<32x1xf32, #tpu.memory_space<vmem>>, %arg6: memref<32x1xf32, #tpu.memory_space<vmem>>, %arg7: memref<1x1xf32, #tpu.memory_space<smem>>, %arg8: memref<1x4x256xf32, #tpu.memory_space<vmem>>, %arg9: memref<8x256xf32, #tpu.memory_space<vmem>>) attributes {dimension_semantics = [#tpu.dimension_semantics<parallel>, #tpu.dimension_semantics<parallel>], iteration_bounds = array<i64: 2, 1>, scalar_prefetch = 0 : i64, scratch_operands = 1 : i64, tpu.core_type = #tpu.core_type<tc>, window_params = [{transform_indices = @transform_0, window_bounds = array<i64: 1, 4, 256>}, {transform_indices = @transform_1, window_bounds = array<i64: 1, 4, 256>}, {pipeline_mode = #tpu.pipeline_mode<synchronous>, transform_indices = @transform_2, window_bounds = array<i64: 32, 8>}, {pipeline_mode = #tpu.pipeline_mode<synchronous>, transform_indices = @transform_3, window_bounds = array<i64: 32, 1>}, {pipeline_mode = #tpu.pipeline_mode<synchronous>, transform_indices = @transform_4, window_bounds = array<i64: 32, 1>}, {transform_indices = @transform_5, window_bounds = array<i64: 1, 1>}, {transform_indices = @transform_6, window_bounds = array<i64: 1, 4, 256>}]} {
    %c0 = arith.constant 0 : index
    %c0_0 = arith.constant 0 : index
    %c0_1 = arith.constant 0 : index
    %0 = vector.load %arg3[%c0, %c0_0, %c0_1] : memref<1x4x256xf32, #tpu.memory_space<vmem>>, vector<1x4x256xf32>
    %1 = vector.shape_cast %0 : vector<1x4x256xf32> to vector<4x256xf32>
    %c0_2 = arith.constant 0 : index
    %c0_3 = arith.constant 0 : index
    %c0_4 = arith.constant 0 : index
    %2 = vector.load %arg2[%c0_2, %c0_3, %c0_4] : memref<1x4x256xf32, #tpu.memory_space<vmem>>, vector<1x4x256xf32>
    %3 = vector.shape_cast %2 : vector<1x4x256xf32> to vector<4x256xf32>
    %c0_5 = arith.constant 0 : index
    %c0_6 = arith.constant 0 : index
    %4 = vector.load %arg9[%c0_5, %c0_6] : memref<8x256xf32, #tpu.memory_space<vmem>>, vector<4x256xf32>
    tpu.vector_store %arg9[%c0_5, %c0_6], %3 {strides = array<i32>} : memref<8x256xf32, #tpu.memory_space<vmem>>, vector<4x256xf32>,
    %c4 = arith.constant 4 : index
    %c0_7 = arith.constant 0 : index
    %5 = vector.load %arg9[%c4, %c0_7] : memref<8x256xf32, #tpu.memory_space<vmem>>, vector<4x256xf32>
    tpu.vector_store %arg9[%c4, %c0_7], %1 {strides = array<i32>} : memref<8x256xf32, #tpu.memory_space<vmem>>, vector<4x256xf32>,
    %c0_8 = arith.constant 0 : index
    %c0_9 = arith.constant 0 : index
    %6 = vector.load %arg4[%c0_8, %c0_9] : memref<32x8xf32, #tpu.memory_space<vmem>>, vector<32x8xf32>
    %c0_10 = arith.constant 0 : index
    %c0_11 = arith.constant 0 : index
    %7 = vector.load %arg9[%c0_10, %c0_11] : memref<8x256xf32, #tpu.memory_space<vmem>>, vector<8x256xf32>
    %cst = arith.constant dense<0.000000e+00> : vector<32x256xf32>
    %8 = tpu.matmul %6, %7, %cst {dimension_numbers = #tpu.dot_dimension_numbers<[1], [0], [0], [1], [0, 0, 1, 1], [], []>} : vector<32x8xf32>, vector<8x256xf32>, vector<32x256xf32> -> vector<32x256xf32>
    %c0_12 = arith.constant 0 : index
    %c0_13 = arith.constant 0 : index
    %9 = vector.load %arg5[%c0_12, %c0_13] : memref<32x1xf32, #tpu.memory_space<vmem>>, vector<32x1xf32>
    %10 = vector.broadcast %9 : vector<32x1xf32> to vector<32x256xf32>
    %11 = arith.addf %8, %10 : vector<32x256xf32>
    %cst_14 = arith.constant 0.000000e+00 : f32
    %12 = vector.broadcast %cst_14 : f32 to vector<32x256xf32>
    %13 = arith.maximumf %11, %12 : vector<32x256xf32>
    %c0_15 = arith.constant 0 : index
    %c0_16 = arith.constant 0 : index
    %14 = vector.load %arg6[%c0_15, %c0_16] : memref<32x1xf32, #tpu.memory_space<vmem>>, vector<32x1xf32>
    %15 = vector.broadcast %14 : vector<32x1xf32> to vector<32x256xf32>
    %16 = arith.mulf %13, %15 : vector<32x256xf32>
    %cst_17 = arith.constant dense<0.000000e+00> : vector<256xf32>
    %17 = vector.multi_reduction <add>, %16, %cst_17 [0] : vector<32x256xf32> to vector<256xf32>
    %18 = vector.shape_cast %17 : vector<256xf32> to vector<1x256xf32>
    %c0_18 = arith.constant 0 : index
    %c0_19 = arith.constant 0 : index
    %19 = memref.load %arg7[%c0_18, %c0_19] : memref<1x1xf32, #tpu.memory_space<smem>>
    %20 = vector.broadcast %19 : f32 to vector<1x256xf32>
    %21 = arith.addf %18, %20 : vector<1x256xf32>
    %22 = arith.negf %21 : vector<1x256xf32>
    %23 = math.exp %22 : vector<1x256xf32>
    %cst_20 = arith.constant 1.000000e+00 : f32
    %24 = vector.broadcast %cst_20 : f32 to vector<1x256xf32>
    %25 = arith.addf %24, %23 : vector<1x256xf32>
    %26 = arith.divf %24, %25 : vector<1x256xf32>
    %27 = vector.broadcast %26 : vector<1x256xf32> to vector<4x256xf32>
    %28 = arith.mulf %1, %27 : vector<4x256xf32>
    %c0_21 = arith.constant 0 : index
    %c0_22 = arith.constant 0 : index
    %c0_23 = arith.constant 0 : index
    %29 = vector.load %arg8[%c0_21, %c0_22, %c0_23] : memref<1x4x256xf32, #tpu.memory_space<vmem>>, vector<1x4x256xf32>
    %30 = vector.shape_cast %29 : vector<1x4x256xf32> to vector<4x256xf32>
    %31 = vector.shape_cast %28 : vector<4x256xf32> to vector<1x4x256xf32>
    tpu.vector_store %arg8[%c0_21, %c0_22, %c0_23], %31 {strides = array<i32>} : memref<1x4x256xf32, #tpu.memory_space<vmem>>, vector<1x4x256xf32>,
    return
  }
  func.func @transform_0(%arg0: i32, %arg1: i32) -> (i32, i32, i32) {
    %c0_i32 = arith.constant 0 : i32
    %c0_i32_0 = arith.constant 0 : i32
    return %arg0, %c0_i32, %arg1 : i32, i32, i32
  }
  func.func @transform_1(%arg0: i32, %arg1: i32) -> (i32, i32, i32) {
    %c0_i32 = arith.constant 0 : i32
    %c0_i32_0 = arith.constant 0 : i32
    return %arg0, %c0_i32, %arg1 : i32, i32, i32
  }
  func.func @transform_2(%arg0: i32, %arg1: i32) -> (i32, i32) {
    %c0_i32 = arith.constant 0 : i32
    %c0_i32_0 = arith.constant 0 : i32
    %c0_i32_1 = arith.constant 0 : i32
    return %c0_i32, %c0_i32_0 : i32, i32
  }
  func.func @transform_3(%arg0: i32, %arg1: i32) -> (i32, i32) {
    %c0_i32 = arith.constant 0 : i32
    %c0_i32_0 = arith.constant 0 : i32
    %c0_i32_1 = arith.constant 0 : i32
    return %c0_i32, %c0_i32_0 : i32, i32
  }
  func.func @transform_4(%arg0: i32, %arg1: i32) -> (i32, i32) {
    %c0_i32 = arith.constant 0 : i32
    %c0_i32_0 = arith.constant 0 : i32
    %c0_i32_1 = arith.constant 0 : i32
    return %c0_i32, %c0_i32_0 : i32, i32
  }
  func.func @transform_5(%arg0: i32, %arg1: i32) -> (i32, i32) {
    %c0_i32 = arith.constant 0 : i32
    %c0_i32_0 = arith.constant 0 : i32
    %c0_i32_1 = arith.constant 0 : i32
    return %c0_i32, %c0_i32_0 : i32, i32
  }
  func.func @transform_6(%arg0: i32, %arg1: i32) -> (i32, i32, i32) {
    %c0_i32 = arith.constant 0 : i32
    %c0_i32_0 = arith.constant 0 : i32
    return %arg0, %c0_i32, %arg1 : i32, i32, i32
  }
}

</mosaic_0001>

<llo_original>
// kernel: attention_block_nchw.1
$region0: #{attention_block_nchw.1}
  #allocation0 [shape = 'u32[]', space=smem, size = 0x4, offset = 0x4, fixed_abs, tag = 'smem constant byte address 0x4 - core index']
  #allocation1 [shape = 'u32[144,128]{1,0:T(1,128)}', space=vmem, size = 0x12000, scoped, tag = 'internal scratch']
  #allocation2 [shape = 'f32[8,256]{1,0:T(8,128)}', space=vmem, size = 0x2000, scoped, tag = 'scratch operand']
  #allocation3 [shape = 'f32[1,1]{1,0:T(1,128)S(6)}', space=smem, size = 0x200, scoped, tag = 'scoped memory for attention_block_nchw.1']
  %s0 = inlined_call_operand.vmem [shape: f32[2,4,256], index: 0, kind: input, shape index: {}]
  %s1 = inlined_call_operand.vmem [shape: f32[2,4,256], index: 1, kind: input, shape index: {}]
  %s2 = inlined_call_operand.vmem [shape: f32[32,8], index: 2, kind: input, shape index: {}]
  %s3 = inlined_call_operand.vmem [shape: f32[32,1], index: 3, kind: input, shape index: {}]
  %s4 = inlined_call_operand.vmem [shape: f32[32,1], index: 4, kind: input, shape index: {}]
  %s5 = inlined_call_operand.<no memory space> [shape: f32[1,1], index: 5, kind: input, shape index: {}]
  %s6 = inlined_call_operand.vmem [shape: f32[2,4,256], index: 6, kind: output, shape index: {}]
  %s7 = sld [smem:[#allocation0]]
  $region57: #{attention_block_nchw.1} parent=0
    _
  %s9 = ssub.s32 1, %s7
  %s10 = scalar_select 0, %s9, %s7
  %11 = sst [smem:[#allocation3]] %s5
  loop: start=0, step=1, limit=4
  $region2: #{attention_block_nchw.1} parent=0 // loop_pre_header
    _
  $region3: #{attention_block_nchw.1} parent=0 // loop_header
    %s13 = sphi 0, %s17
    %p14 = scmp.ge.s32.totalorder %s13, 4
    %s20 = sphi 0, %s32
    %s21 = sphi 0, %s28
    %s22 = sphi 0, %s20
    %s23 = sphi 0, %s21
    %s24 = sphi 0, %s22
    %s25 = sphi 0, %s23
    %s37 = sphi 0, %s39
    %s40 = sphi 0, %s37
    %s41 = sphi 0, %s40
    %s57 = sphi 0, %s41
    %s65 = sphi 0, %s67
    %s68 = sphi 0, %s65
    %s69 = sphi 0, %s68
    %s85 = sphi 0, %s69
    %s89 = sphi 0, %s89
    %s91 = sphi 0, %s89
    %s92 = sphi 0, %s91
    %s106 = sphi 0, %s92
    %s110 = sphi 0, %s110
    %s112 = sphi 0, %s110
    %s113 = sphi 0, %s112
    %s127 = sphi 0, %s113
    %s131 = sphi 0, %s131
    %s133 = sphi 0, %s131
    %s134 = sphi 0, %s133
    %s148 = sphi 0, %s134
    %s152 = sphi 0, %s152
    %s154 = sphi 0, %s152
    %s155 = sphi 0, %s154
    %s169 = sphi 0, %s155
    %s177 = sphi 0, %s179
    %s180 = sphi 0, %s177
    %s181 = sphi 0, %s180
    %s197 = sphi 0, %s181
  $region4: #{attention_block_nchw.1} parent=0 // loop_header_branch
    %16 = sbr.rel (%p14) target = $region8
  $region5: #{attention_block_nchw.1} parent=0 // loop_body
    %s18 = ssub.s32 %s13, 1
    %s19 = ssub.s32 %s13, 2
    %s26 = sadd.s32 1, %s21
    %p27 = scmp.ge.s32.totalorder %s26, 1
    %s28 = scalar_select %p27, 0, %s26
    %s29 = sadd.s32 1, %s20
    %s30 = scalar_select %p27, %s29, %s20
    %p31 = scmp.ge.s32.totalorder %s30, 2
    %s32 = scalar_select %p31, 0, %s30
    %s33 = ssub.s32 %s20, %s32
    %s34 = ssub.s32 %s21, %s28
    %s35 = sor.u32 %s33, %s34
    %p36 = scmp.eq.s32.totalorder %s35, 0
    %s38 = sadd.s32 %s37, 1
    %s39 = scalar_select %p36, %s37, %s38
    %p42 = pneg %p36
    %p43 = scmp.eq.s32.totalorder %s13, 1
    %p44 = por %p42, %p43
    %p45 = scmp.ne.s32.totalorder %s37, %s40
    %p46 = scmp.eq.s32.totalorder %s13, 0
    %p47 = por %p45, %p46
    %p48 = scmp.ne.s32.totalorder %s37, %s40
    %p49 = scmp.eq.s32.totalorder %s18, 1
    %p50 = por %p48, %p49
    %p51 = scmp.ne.s32.totalorder %s40, %s41
    %p52 = scmp.eq.s32.totalorder %s18, 0
    %p53 = por %p51, %p52
    %p54 = scmp.ne.s32.totalorder %s40, %s41
    %p55 = scmp.eq.s32.totalorder %s19, 1
    %p56 = por %p54, %p55
    %p58 = scmp.ne.s32.totalorder %s41, %s57
    %p59 = scmp.eq.s32.totalorder %s19, 0
    %p60 = por %p58, %p59
    %s61 = ssub.s32 %s20, %s32
    %s62 = ssub.s32 %s21, %s28
    %s63 = sor.u32 %s61, %s62
    %p64 = scmp.eq.s32.totalorder %s63, 0
    %s66 = sadd.s32 %s65, 1
    %s67 = scalar_select %p64, %s65, %s66
    %p70 = pneg %p64
    %p71 = scmp.eq.s32.totalorder %s13, 1
    %p72 = por %p70, %p71
    %p73 = scmp.ne.s32.totalorder %s65, %s68
    %p74 = scmp.eq.s32.totalorder %s13, 0
    %p75 = por %p73, %p74
    %p76 = scmp.ne.s32.totalorder %s65, %s68
    %p77 = scmp.eq.s32.totalorder %s18, 1
    %p78 = por %p76, %p77
    %p79 = scmp.ne.s32.totalorder %s68, %s69
    %p80 = scmp.eq.s32.totalorder %s18, 0
    %p81 = por %p79, %p80
    %p82 = scmp.ne.s32.totalorder %s68, %s69
    %p83 = scmp.eq.s32.totalorder %s19, 1
    %p84 = por %p82, %p83
    %p86 = scmp.ne.s32.totalorder %s69, %s85
    %p87 = scmp.eq.s32.totalorder %s19, 0
    %p88 = por %p86, %p87
    %s90 = sadd.s32 %s89, 1
    %p93 = scmp.eq.s32.totalorder %s13, 1
    %p94 = scmp.ne.s32.totalorder %s89, %s91
    %p95 = scmp.eq.s32.totalorder %s13, 0
    %p96 = por %p94, %p95
    %p97 = scmp.ne.s32.totalorder %s89, %s91
    %p98 = scmp.eq.s32.totalorder %s18, 1
    %p99 = por %p97, %p98
    %p100 = scmp.ne.s32.totalorder %s91, %s92
    %p101 = scmp.eq.s32.totalorder %s18, 0
    %p102 = por %p100, %p101
    %p103 = scmp.ne.s32.totalorder %s91, %s92
    %p104 = scmp.eq.s32.totalorder %s19, 1
    %p105 = por %p103, %p104
    %p107 = scmp.ne.s32.totalorder %s92, %s106
    %p108 = scmp.eq.s32.totalorder %s19, 0
    %p109 = por %p107, %p108
    %s111 = sadd.s32 %s110, 1
    %p114 = scmp.eq.s32.totalorder %s13, 1
    %p115 = scmp.ne.s32.totalorder %s110, %s112
    %p116 = scmp.eq.s32.totalorder %s13, 0
    %p117 = por %p115, %p116
    %p118 = scmp.ne.s32.totalorder %s110, %s112
    %p119 = scmp.eq.s32.totalorder %s18, 1
    %p120 = por %p118, %p119
    %p121 = scmp.ne.s32.totalorder %s112, %s113
    %p122 = scmp.eq.s32.totalorder %s18, 0
    %p123 = por %p121, %p122
    %p124 = scmp.ne.s32.totalorder %s112, %s113
    %p125 = scmp.eq.s32.totalorder %s19, 1
    %p126 = por %p124, %p125
    %p128 = scmp.ne.s32.totalorder %s113, %s127
    %p129 = scmp.eq.s32.totalorder %s19, 0
    %p130 = por %p128, %p129
    %s132 = sadd.s32 %s131, 1
    %p135 = scmp.eq.s32.totalorder %s13, 1
    %p136 = scmp.ne.s32.totalorder %s131, %s133
    %p137 = scmp.eq.s32.totalorder %s13, 0
    %p138 = por %p136, %p137
    %p139 = scmp.ne.s32.totalorder %s131, %s133
    %p140 = scmp.eq.s32.totalorder %s18, 1
    %p141 = por %p139, %p140
    %p142 = scmp.ne.s32.totalorder %s133, %s134
    %p143 = scmp.eq.s32.totalorder %s18, 0
    %p144 = por %p142, %p143
    %p145 = scmp.ne.s32.totalorder %s133, %s134
    %p146 = scmp.eq.s32.totalorder %s19, 1
    %p147 = por %p145, %p146
    %p149 = scmp.ne.s32.totalorder %s134, %s148
    %p150 = scmp.eq.s32.totalorder %s19, 0
    %p151 = por %p149, %p150
    %s153 = sadd.s32 %s152, 1
    %p156 = scmp.eq.s32.totalorder %s13, 1
    %p157 = scmp.ne.s32.totalorder %s152, %s154
    %p158 = scmp.eq.s32.totalorder %s13, 0
    %p159 = por %p157, %p158
    %p160 = scmp.ne.s32.totalorder %s152, %s154
    %p161 = scmp.eq.s32.totalorder %s18, 1
    %p162 = por %p160, %p161
    %p163 = scmp.ne.s32.totalorder %s154, %s155
    %p164 = scmp.eq.s32.totalorder %s18, 0
    %p165 = por %p163, %p164
    %p166 = scmp.ne.s32.totalorder %s154, %s155
    %p167 = scmp.eq.s32.totalorder %s19, 1
    %p168 = por %p166, %p167
    %p170 = scmp.ne.s32.totalorder %s155, %s169
    %p171 = scmp.eq.s32.totalorder %s19, 0
    %p172 = por %p170, %p171
    %s173 = ssub.s32 %s20, %s32
    %s174 = ssub.s32 %s21, %s28
    %s175 = sor.u32 %s173, %s174
    %p176 = scmp.eq.s32.totalorder %s175, 0
    %s178 = sadd.s32 %s177, 1
    %s179 = scalar_select %p176, %s177, %s178
    %p182 = pneg %p176
    %p183 = scmp.eq.s32.totalorder %s13, 1
    %p184 = por %p182, %p183
    %p185 = scmp.ne.s32.totalorder %s177, %s180
    %p186 = scmp.eq.s32.totalorder %s13, 0
    %p187 = por %p185, %p186
    %p188 = scmp.ne.s32.totalorder %s177, %s180
    %p189 = scmp.eq.s32.totalorder %s18, 1
    %p190 = por %p188, %p189
    %p191 = scmp.ne.s32.totalorder %s180, %s181
    %p192 = scmp.eq.s32.totalorder %s18, 0
    %p193 = por %p191, %p192
    %p194 = scmp.ne.s32.totalorder %s180, %s181
    %p195 = scmp.eq.s32.totalorder %s19, 1
    %p196 = por %p194, %p195
    %p198 = scmp.ne.s32.totalorder %s181, %s197
    %p199 = scmp.eq.s32.totalorder %s19, 0
    %p200 = por %p198, %p199
    %p201 = scmp.le.s32.totalorder 1, %s13
    %p202 = scmp.lt.s32.totalorder %s13, 3
    %p203 = pnand %p201, %p202
    %p204 = pneg %p203
    // Predicated region
    $region9: #{attention_block_nchw.1} parent=5 // pred_check
      _
    $region10: #{attention_block_nchw.1} parent=5 // pred_check_branch
      %206 = sbr.rel (%p203) target = $region12
    $region11: #{attention_block_nchw.1} parent=5 // pred_region
      %s207 = ssub.s32 %s13, 1
      // Predicated region
      $region13: #{attention_block_nchw.1} parent=11 // pred_check
        %p208 = pneg %p102
      $region14: #{attention_block_nchw.1} parent=11 // pred_check_branch
        %210 = sbr.rel (%p208) target = $region16
      $region15: #{attention_block_nchw.1} parent=11 // pred_region
        _
      $region16: #{attention_block_nchw.1} parent=11 // pred_fallthru
        _
      // Predicated region
      $region17: #{attention_block_nchw.1} parent=11 // pred_check
        %p211 = pneg %p123
      $region18: #{attention_block_nchw.1} parent=11 // pred_check_branch
        %213 = sbr.rel (%p211) target = $region20
      $region19: #{attention_block_nchw.1} parent=11 // pred_region
        _
      $region20: #{attention_block_nchw.1} parent=11 // pred_fallthru
        _
      // Predicated region
      $region21: #{attention_block_nchw.1} parent=11 // pred_check
        %p214 = pneg %p144
      $region22: #{attention_block_nchw.1} parent=11 // pred_check_branch
        %216 = sbr.rel (%p214) target = $region24
      $region23: #{attention_block_nchw.1} parent=11 // pred_region
        _
      $region24: #{attention_block_nchw.1} parent=11 // pred_fallthru
        _
      // Predicated region
      $region25: #{attention_block_nchw.1} parent=11 // pred_check
        %p217 = pneg %p165
      $region26: #{attention_block_nchw.1} parent=11 // pred_check_branch
        %219 = sbr.rel (%p217) target = $region28
      $region27: #{attention_block_nchw.1} parent=11 // pred_region
        _
      $region28: #{attention_block_nchw.1} parent=11 // pred_fallthru
        _
    $region12: #{attention_block_nchw.1} parent=5 // pred_fallthru
      _
    %p220 = scmp.lt.s32.totalorder %s13, 2
    // Predicated region
    $region29: #{attention_block_nchw.1} parent=5 // pred_check
      %p221 = pneg %p220
    $region30: #{attention_block_nchw.1} parent=5 // pred_check_branch
      %223 = sbr.rel (%p221) target = $region32
    $region31: #{attention_block_nchw.1} parent=5 // pred_region
      // Predicated region
      $region33: #{attention_block_nchw.1} parent=31 // pred_check
        %p224 = pneg %p47
      $region34: #{attention_block_nchw.1} parent=31 // pred_check_branch
        %226 = sbr.rel (%p224) target = $region36
      $region35: #{attention_block_nchw.1} parent=31 // pred_region
        %s227 = smul.u32 2, %s21
        %p228 = scmp.lt.s32.totalorder %s20, 1
        %s229 = scalar_select %p228, %s20, 1
        %p230 = scmp.lt.s32.totalorder %s227, 1
        %s231 = scalar_select %p230, %s227, 1
        %s232 = smul.addr %s229, 2
        %s233 = sadd.s32 %s231, %s232
        %s234 = smul.addr %s233, 4
        %s235 = scalar_lea.vmem %s0, %s234
        %s236 = smul.u32 2, %s21
      $region36: #{attention_block_nchw.1} parent=31 // pred_fallthru
        _
      // Predicated region
      $region37: #{attention_block_nchw.1} parent=31 // pred_check
        %p237 = pneg %p75
      $region38: #{attention_block_nchw.1} parent=31 // pred_check_branch
        %239 = sbr.rel (%p237) target = $region40
      $region39: #{attention_block_nchw.1} parent=31 // pred_region
        %s240 = smul.u32 2, %s21
        %p241 = scmp.lt.s32.totalorder %s20, 1
        %s242 = scalar_select %p241, %s20, 1
        %p243 = scmp.lt.s32.totalorder %s240, 1
        %s244 = scalar_select %p243, %s240, 1
        %s245 = smul.addr %s242, 2
        %s246 = sadd.s32 %s244, %s245
        %s247 = smul.addr %s246, 4
        %s248 = scalar_lea.vmem %s1, %s247
        %s249 = smul.u32 2, %s21
      $region40: #{attention_block_nchw.1} parent=31 // pred_fallthru
        _
    $region32: #{attention_block_nchw.1} parent=5 // pred_fallthru
      _
    %p250 = scmp.le.s32.totalorder 1, %s13
    %p251 = scmp.lt.s32.totalorder %s13, 3
    %p252 = pnand %p250, %p251
    %p253 = pneg %p252
    // Predicated region
    $region41: #{attention_block_nchw.1} parent=5 // pred_check
      _
    $region42: #{attention_block_nchw.1} parent=5 // pred_check_branch
      %255 = sbr.rel (%p252) target = $region44
    $region43: #{attention_block_nchw.1} parent=5 // pred_region
      %s256 = ssub.s32 %s13, 1
      %s257 = smul.u32 2, %s23
      %p258 = scmp.lt.s32.totalorder %s22, 1
      %s259 = scalar_select %p258, %s22, 1
      %p260 = scmp.lt.s32.totalorder %s257, 1
      %s261 = scalar_select %p260, %s257, 1
      %s262 = smul.addr %s259, 2
      %s263 = sadd.s32 %s261, %s262
      %s264 = smul.addr %s263, 4
      %s265 = scalar_lea.vmem %s0, %s264
      %p266 = pneg %p53
      %p267 = pneg %p50
      %s268 = smul.u32 2, %s23
      %p269 = scmp.lt.s32.totalorder %s22, 1
      %s270 = scalar_select %p269, %s22, 1
      %p271 = scmp.lt.s32.totalorder %s268, 1
      %s272 = scalar_select %p271, %s268, 1
      %s273 = smul.addr %s270, 2
      %s274 = sadd.s32 %s272, %s273
      %s275 = smul.addr %s274, 4
      %s276 = scalar_lea.vmem %s1, %s275
      %p277 = pneg %p81
      %p278 = pneg %p78
      %p279 = pneg %p102
      %p280 = pneg %p99
      %p281 = pneg %p123
      %p282 = pneg %p120
      %p283 = pneg %p144
      %p284 = pneg %p141
      %p285 = pneg %p165
      %p286 = pneg %p162
      %p287 = pneg %p193
      %p288 = pneg %p190
      %s289 = smul.u32 2, %s23
      %p290 = scmp.lt.s32.totalorder %s22, 1
      %s291 = scalar_select %p290, %s22, 1
      %p292 = scmp.lt.s32.totalorder %s289, 1
      %s293 = scalar_select %p292, %s289, 1
      %s294 = smul.addr %s291, 2
      %s295 = sadd.s32 %s293, %s294
      %s296 = smul.addr %s295, 4
      %s297 = scalar_lea.vmem %s6, %s296
      %s298 = smul.u32 2, %s23
      %p299 = scmp.lt.s32.totalorder %s22, 1
      %s300 = scalar_select %p299, %s22, 1
      %p301 = scmp.lt.s32.totalorder %s298, 1
      %s302 = scalar_select %p301, %s298, 1
      %s303 = smul.addr %s300, 2
      %s304 = sadd.s32 %s302, %s303
      %s305 = smul.addr %s304, 4
      %s306 = scalar_lea.vmem %s0, %s305
      %s307 = smul.u32 2, %s23
      %s308 = smul.u32 2, %s23
      %p309 = scmp.lt.s32.totalorder %s22, 1
      %s310 = scalar_select %p309, %s22, 1
      %p311 = scmp.lt.s32.totalorder %s308, 1
      %s312 = scalar_select %p311, %s308, 1
      %s313 = smul.addr %s310, 2
      %s314 = sadd.s32 %s312, %s313
      %s315 = smul.addr %s314, 4
      %s316 = scalar_lea.vmem %s1, %s315
      %s317 = smul.u32 2, %s23
      %s318 = smul.u32 2, %s23
      %p319 = scmp.lt.s32.totalorder %s22, 1
      %s320 = scalar_select %p319, %s22, 1
      %p321 = scmp.lt.s32.totalorder %s318, 1
      %s322 = scalar_select %p321, %s318, 1
      %s323 = smul.addr %s320, 2
      %s324 = sadd.s32 %s322, %s323
      %s325 = smul.addr %s324, 4
      %s326 = scalar_lea.vmem %s6, %s325
      %s327 = smul.u32 2, %s23
      %v328 = vld [vmem:[%s316] sm:$0xff]
      %v329 = vld [vmem:[%s306] sm:$0xff]
      %v331 = vcombine.high %v329, %v329
      %333 = vst [vmem:[#allocation2] sm:$0xf] %v329
      %334 = vst [vmem:[#allocation2 + $0x8] sm:$0xf] %v331
      %v336 = vcombine.low %v328, %v328
      %338 = vst [vmem:[#allocation2] sm:$0xf0] %v336
      %339 = vst [vmem:[#allocation2 + $0x8] sm:$0xf0] %v328
      %v340 = vld [vmem:[%s2] sm:$0xff]
      %v341 = vld [vmem:[%s2 + $0x8] sm:$0xff]
      %v342 = vld [vmem:[%s2 + $0x10] sm:$0xff]
      %v343 = vld [vmem:[%s2 + $0x18] sm:$0xff]
      %v344 = vld [vmem:[#allocation2] sm:$0xff]
      %v345 = vld [vmem:[#allocation2 + $0x8] sm:$0xff]
      %v346 = vld [vmem:[%s3] sm:$0xff]
      %v347 = vld [vmem:[%s3 + $0x8] sm:$0xff]
      %v348 = vld [vmem:[%s3 + $0x10] sm:$0xff]
      %v349 = vld [vmem:[%s3 + $0x18] sm:$0xff]
      %351 = vset.pattern.permute.xlu0 0
      %352 = vperm.xlu0 %351, %v346
      %v353 = vpop.permute.xlu0 %352
      %356 = vset.pattern.permute.xlu0 0
      %357 = vperm.xlu0 %356, %v347
      %v358 = vpop.permute.xlu0 %357
      %361 = vset.pattern.permute.xlu0 0
      %362 = vperm.xlu0 %361, %v348
      %v363 = vpop.permute.xlu0 %362
      %366 = vset.pattern.permute.xlu0 0
      %367 = vperm.xlu0 %366, %v349
      %v368 = vpop.permute.xlu0 %367
      %vm370 = vcmask 64512
      %v372 = vsel %vm370, %v340, 0
      %v375 = vsel %vm370, %v341, 0
      %v378 = vsel %vm370, %v342, 0
      %v381 = vsel %vm370, %v343, 0
      %383 = vmatprep.subr.mxu0 %v345
      %384 = vmatpush1.msra.mxu0 %v344
      %385 = vmatprep.subr.mxu0 0.0
      %386 = vmatpush1.msra.mxu0 0.0
      %387 = vmatprep.subr.mxu0 0.0
      %388 = vmatpush1.msra.mxu0 0.0
      %389 = vmatprep.subr.mxu0 0.0
      %390 = vmatpush1.msra.mxu0 0.0
      %391 = vmatprep.subr.mxu0 0.0
      %392 = vmatpush1.msra.mxu0 0.0
      %393 = vmatprep.subr.mxu0 0.0
      %394 = vmatpush1.msra.mxu0 0.0
      %395 = vmatprep.subr.mxu0 0.0
      %396 = vmatpush1.msra.mxu0 0.0
      %397 = vmatprep.subr.mxu0 0.0
      %398 = vmatpush1.msra.mxu0 0.0
      %399 = vmatprep.subr.mxu0 0.0
      %400 = vmatpush1.msra.mxu0 0.0
      %401 = vmatprep.subr.mxu0 0.0
      %402 = vmatpush1.msra.mxu0 0.0
      %403 = vmatprep.subr.mxu0 0.0
      %404 = vmatpush1.msra.mxu0 0.0
      %405 = vmatprep.subr.mxu0 0.0
      %406 = vmatpush1.msra.mxu0 0.0
      %407 = vmatprep.subr.mxu0 0.0
      %408 = vmatpush1.msra.mxu0 0.0
      %409 = vmatprep.subr.mxu0 0.0
      %410 = vmatpush1.msra.mxu0 0.0
      %411 = vmatprep.subr.mxu0 0.0
      %412 = vmatpush1.msra.mxu0 0.0
      %413 = vmatprep.subr.mxu0 0.0
      %414 = vmatpush1.msra.mxu0 0.0
      %415 = vmatprep.subr.mxu0 0.0
      %416 = vmatpush1.msra.mxu0 0.0
      %417 = vmatprep.subr.mxu0 0.0
      %418 = vmatpush1.msra.mxu0 0.0
      %419 = vmatprep.subr.mxu0 0.0
      %420 = vmatpush1.msra.mxu0 0.0
      %421 = vmatprep.subr.mxu0 0.0
      %422 = vmatpush1.msra.mxu0 0.0
      %423 = vmatprep.subr.mxu0 0.0
      %424 = vmatpush1.msra.mxu0 0.0
      %425 = vmatprep.subr.mxu0 0.0
      %426 = vmatpush1.msra.mxu0 0.0
      %427 = vmatprep.subr.mxu0 0.0
      %428 = vmatpush1.msra.mxu0 0.0
      %429 = vmatprep.subr.mxu0 0.0
      %430 = vmatpush1.msra.mxu0 0.0
      %431 = vmatprep.subr.mxu0 0.0
      %432 = vmatpush1.msra.mxu0 0.0
      %433 = vmatprep.subr.mxu0 0.0
      %434 = vmatpush1.msra.mxu0 0.0
      %435 = vmatprep.subr.mxu0 0.0
      %436 = vmatpush1.msra.mxu0 0.0
      %437 = vmatprep.subr.mxu0 0.0
      %438 = vmatpush1.msra.mxu0 0.0
      %439 = vmatprep.subr.mxu0 0.0
      %440 = vmatpush1.msra.mxu0 0.0
      %441 = vmatprep.subr.mxu0 0.0
      %442 = vmatpush1.msra.mxu0 0.0
      %443 = vmatprep.subr.mxu0 0.0
      %444 = vmatpush1.msra.mxu0 0.0
      %445 = vmatprep.subr.mxu0 0.0
      %446 = vmatpush1.msra.mxu0 0.0
      %447 = vmatprep.mubr.f32.mxu0 0.0
      %448 = vmatmul.mubr.f32.gmra.mrb[0].mxu0 %v372
      %v449 = vpop.f32.mrb[0].mxu0
      %v450 = vadd.f32 %v353, %v449
      %v451 = vpop.f32.mrb[0].mxu0
      %v452 = vadd.f32 %v353, %v451
      %453 = vmatprep.mubr.f32.mxu0 0.0
      %454 = vmatmul.mubr.f32.gmra.mrb[0].mxu0 %v375
      %v455 = vpop.f32.mrb[0].mxu0
      %v456 = vadd.f32 %v358, %v455
      %v457 = vpop.f32.mrb[0].mxu0
      %v458 = vadd.f32 %v358, %v457
      %459 = vmatprep.mubr.f32.mxu0 0.0
      %460 = vmatmul.mubr.f32.gmra.mrb[0].mxu0 %v378
      %v461 = vpop.f32.mrb[0].mxu0
      %v462 = vadd.f32 %v363, %v461
      %v463 = vpop.f32.mrb[0].mxu0
      %v464 = vadd.f32 %v363, %v463
      %465 = vmatprep.mubr.f32.mxu0 0.0
      %466 = vmatmul.mubr.f32.gmra.mrb[0].mxu0 %v381
      %v467 = vpop.f32.mrb[0].mxu0
      %v468 = vadd.f32 %v368, %v467
      %v469 = vpop.f32.mrb[0].mxu0
      %v470 = vadd.f32 %v368, %v469
      %471 = vdwg.mxu0
      %v472 = vmax.f32 %v450, 0.0
      %v473 = vmax.f32 %v452, 0.0
      %v474 = vmax.f32 %v456, 0.0
      %v475 = vmax.f32 %v458, 0.0
      %v476 = vmax.f32 %v462, 0.0
      %v477 = vmax.f32 %v464, 0.0
      %v478 = vmax.f32 %v468, 0.0
      %v479 = vmax.f32 %v470, 0.0
      %v480 = vld [vmem:[%s4] sm:$0xff]
      %v481 = vld [vmem:[%s4 + $0x8] sm:$0xff]
      %v482 = vld [vmem:[%s4 + $0x10] sm:$0xff]
      %v483 = vld [vmem:[%s4 + $0x18] sm:$0xff]
      %485 = vset.pattern.permute.xlu0 0
      %486 = vperm.xlu0 %485, %v480
      %v487 = vpop.permute.xlu0 %486
      %490 = vset.pattern.permute.xlu0 0
      %491 = vperm.xlu0 %490, %v481
      %v492 = vpop.permute.xlu0 %491
      %495 = vset.pattern.permute.xlu0 0
      %496 = vperm.xlu0 %495, %v482
      %v497 = vpop.permute.xlu0 %496
      %500 = vset.pattern.permute.xlu0 0
      %501 = vperm.xlu0 %500, %v483
      %v502 = vpop.permute.xlu0 %501
      %v504 = vmul.f32 %v472, %v487
      %v505 = vmul.f32 %v473, %v487
      %v506 = vmul.f32 %v474, %v492
      %v507 = vmul.f32 %v475, %v492
      %v508 = vmul.f32 %v476, %v497
      %v509 = vmul.f32 %v477, %v497
      %v510 = vmul.f32 %v478, %v502
      %v511 = vmul.f32 %v479, %v502
      %v512 = vadd.f32 %v504, %v506
      %v513 = vadd.f32 %v512, %v508
      %v514 = vadd.f32 %v513, %v510
      %v515 = vrot.slane %v514, 4
      %v516 = vadd.f32 %v514, %v515
      %v517 = vrot.slane %v516, 2
      %v518 = vadd.f32 %v516, %v517
      %v519 = vrot.slane %v518, 1
      %v520 = vadd.f32 %v518, %v519
      %v521 = vadd.f32 %v505, %v507
      %v522 = vadd.f32 %v521, %v509
      %v523 = vadd.f32 %v522, %v511
      %v524 = vrot.slane %v523, 4
      %v525 = vadd.f32 %v523, %v524
      %v526 = vrot.slane %v525, 2
      %v527 = vadd.f32 %v525, %v526
      %v528 = vrot.slane %v527, 1
      %v529 = vadd.f32 %v527, %v528
      %s530 = sld [smem:[#allocation3]]
      %v531 = vstv %s530
      %v532 = vadd.f32 %v520, %v531
      %v533 = vadd.f32 %v529, %v531
      %v534 = vxor.u32 %v532, 2147483648
      %v535 = vxor.u32 %v533, 2147483648
      %v536 = vmul.f32 %v534, 1.442695
      %v537 = vpow.pop %v536
      %v538 = vmul.f32 %v535, 1.442695
      %v539 = vpow.pop %v538
      %v540 = vadd.f32 %v537, 1.0
      %v541 = vadd.f32 %v539, 1.0
      %v542 = vrcp.pop %v540
      %v543 = vmul.f32 1.0, %v542
      %v544 = vrcp.pop %v541
      %v545 = vmul.f32 1.0, %v544
      %v548 = vcombine.low %v543, %v545
      %v550 = vmul.f32 %v328, %v548
      %551 = vst [vmem:[%s326] sm:$0xff] %v550
      %s552 = smul.u32 2, %s23
      %p553 = scmp.lt.s32.totalorder %s22, 1
      %s554 = scalar_select %p553, %s22, 1
      %p555 = scmp.lt.s32.totalorder %s552, 1
      %s556 = scalar_select %p555, %s552, 1
      %s557 = smul.addr %s554, 2
      %s558 = sadd.s32 %s556, %s557
      %s559 = smul.addr %s558, 4
      %s560 = scalar_lea.vmem %s6, %s559
      // Predicated region
      $region45: #{attention_block_nchw.1} parent=43 // pred_check
        %p561 = pneg %p190
      $region46: #{attention_block_nchw.1} parent=43 // pred_check_branch
        %563 = sbr.rel (%p561) target = $region48
      $region47: #{attention_block_nchw.1} parent=43 // pred_region
        %s564 = smul.u32 2, %s23
      $region48: #{attention_block_nchw.1} parent=43 // pred_fallthru
        _
    $region44: #{attention_block_nchw.1} parent=5 // pred_fallthru
      _
    %p565 = scmp.le.s32.totalorder 2, %s13
    // Predicated region
    $region49: #{attention_block_nchw.1} parent=5 // pred_check
      %p566 = pneg %p565
    $region50: #{attention_block_nchw.1} parent=5 // pred_check_branch
      %568 = sbr.rel (%p566) target = $region52
    $region51: #{attention_block_nchw.1} parent=5 // pred_region
      %s569 = ssub.s32 %s13, 2
      // Predicated region
      $region53: #{attention_block_nchw.1} parent=51 // pred_check
        %p570 = pneg %p196
      $region54: #{attention_block_nchw.1} parent=51 // pred_check_branch
        %572 = sbr.rel (%p570) target = $region56
      $region55: #{attention_block_nchw.1} parent=51 // pred_region
        %s573 = smul.u32 2, %s25
        %p574 = scmp.lt.s32.totalorder %s24, 1
        %s575 = scalar_select %p574, %s24, 1
        %p576 = scmp.lt.s32.totalorder %s573, 1
        %s577 = scalar_select %p576, %s573, 1
        %s578 = smul.addr %s575, 2
        %s579 = sadd.s32 %s577, %s578
        %s580 = smul.addr %s579, 4
        %s581 = scalar_lea.vmem %s6, %s580
      $region56: #{attention_block_nchw.1} parent=51 // pred_fallthru
        _
    $region52: #{attention_block_nchw.1} parent=5 // pred_fallthru
      _
  $region6: #{attention_block_nchw.1} parent=0 // loop_footer
    %s17 = sadd.s32 1, %s13
  $region7: #{attention_block_nchw.1} parent=0 // loop_footer_branch
    %12 = sbr.rel target = $region3
  $region8: #{attention_block_nchw.1} parent=0 // loop_exit
    _

</llo_original>
